<compile_context>
chip_gen: v5e
topology: v5e:2x2
jax: 0.10.0
libtpu: 0.0.40
codegen_flags: <defaults>
</compile_context>

<pallas_src>
import jax
import jax.numpy as jnp
from jax.experimental import pallas as pl
from jax.experimental.pallas import tpu as pltpu

N = 8            # number of nodes == attention sequence length
D = 32           # in_features == out_features (residuals require equality)
H = 4            # num attention heads
HD = D // H      # head dim
E = 16           # number of edges
LN_EPS = 1e-5    # nn.LayerNorm default eps
L2_EPS = 1e-12   # F.normalize default eps


def _layer_norm(v, g, b):
    mu = jnp.mean(v, axis=-1, keepdims=True)
    var = jnp.mean((v - mu) ** 2, axis=-1, keepdims=True)
    return (v - mu) * jax.lax.rsqrt(var + LN_EPS) * g + b


def gps_kernel(x_ref, ei_ref, w_ref, b_ref,
               lnl_g_ref, lnl_b_ref, lna_g_ref, lna_b_ref,
               wo_ref, bo_ref, wf1_ref, bf1_ref, wf2_ref, bf2_ref,
               o_ref):
    f32 = jnp.float32
    x = x_ref[...]                                            # [N, D]

    # ---- one fused projection for all 8 linear maps (256 output lanes) ----
    hcat = jnp.dot(x, w_ref[...], preferred_element_type=f32) + b_ref[...]   # [N, 8D]
    h1  = hcat[:, 0 * D:1 * D]
    h23 = hcat[:, 1 * D:3 * D]            # (h2 | h3) adjacent -> fused src gather
    h4  = hcat[:, 3 * D:4 * D]
    res = hcat[:, 4 * D:5 * D]
    q   = hcat[:, 5 * D:6 * D] * (1.0 / float(HD) ** 0.5)
    k   = hcat[:, 6 * D:7 * D]
    v   = hcat[:, 7 * D:8 * D]

    # ---- build gather/scatter masks in-kernel from edge_index ----
    ei = ei_ref[...]                                          # [2, E] int32
    node_ids = jax.lax.broadcasted_iota(jnp.int32, (N, E), 0)  # row = node id
    S_t = (node_ids == ei[0:1, :]).astype(f32)                # [N, E] src one-hot^T
    T_t = (node_ids == ei[1:2, :]).astype(f32)                # [N, E] dst one-hot^T

    # ---------------- local branch: ResGatedGraphConv ----------------
    g23 = jax.lax.dot_general(S_t, h23, (((0,), (0,)), ((), ())),
                              preferred_element_type=f32)     # [E, 2D] = (h2|h3)[src]
    h4e = jax.lax.dot_general(T_t, h4, (((0,), (0,)), ((), ())),
                              preferred_element_type=f32)     # [E, D]  = h4[dst]
    z1 = jax.nn.sigmoid(g23[:, D:2 * D] + h4e)
    he = z1 * g23[:, 0:D]                                     # [E, D]
    agg = jnp.dot(T_t, he, preferred_element_type=f32)        # [N, D] scatter-sum
    count = jnp.maximum(jnp.sum(T_t, axis=1, keepdims=True), 1.0)   # in-degree
    # torch_scatter scatter(..., out=h1.clone(), reduce='mean') semantics:
    z = (h1 + agg) / count + res

    local = jnp.maximum(z, 0.0)                               # ReLU
    local = _layer_norm(local, lnl_g_ref[...], lnl_b_ref[...])
    local = local + x                                         # + h_init

    # ---------------- attention branch: MHA(x, x, x) ----------------
    sc_list = []
    for h_idx in range(H):                                    # static unrolled
        qh = q[:, h_idx * HD:(h_idx + 1) * HD]                # [N, HD]
        kh = k[:, h_idx * HD:(h_idx + 1) * HD]
        sc_list.append(jax.lax.dot_general(
            qh, kh, (((1,), (1,)), ((), ())), preferred_element_type=f32))  # [N, N]
    scores = jnp.concatenate(sc_list, axis=0)                 # [H*N, N] heads on sublanes
    scores = scores - jnp.max(scores, axis=-1, keepdims=True) # one batched softmax
    pexp = jnp.exp(scores)
    pw = pexp / jnp.sum(pexp, axis=-1, keepdims=True)

    oh_list = []
    for h_idx in range(H):
        ph = pw[h_idx * N:(h_idx + 1) * N, :]                 # [N, N]
        vh = v[:, h_idx * HD:(h_idx + 1) * HD]                # [N, HD]
        oh_list.append(jnp.dot(ph, vh, preferred_element_type=f32))
    oh = jnp.concatenate(oh_list, axis=1)                     # [N, D] heads on lanes
    attn = jnp.dot(oh, wo_ref[...], preferred_element_type=f32) + bo_ref[...]

    attn = jnp.maximum(attn, 0.0)                             # ReLU
    attn = _layer_norm(attn, lna_g_ref[...], lna_b_ref[...])
    attn = attn + x                                           # + h_init

    # ---------------- feed-forward + final L2 normalize ----------------
    out = local + attn
    hff = jnp.dot(out, wf1_ref[...], preferred_element_type=f32) + bf1_ref[...]
    hff = jnp.maximum(hff, 0.0)
    hff = jnp.dot(hff, wf2_ref[...], preferred_element_type=f32) + bf2_ref[...]
    # note: `h - self.dropout_ff(h)` in the reference is a no-op (result unused)
    y = out + hff
    nrm = jnp.sqrt(jnp.sum(y * y, axis=-1, keepdims=True))
    o_ref[...] = y / jnp.maximum(nrm, L2_EPS)


def fuse_params(p):
    """One-time weight fusion (kept out of the per-call path)."""
    w_all = jnp.concatenate([p['w1'], p['w2'], p['w3'], p['w4'], p['wr'],
                             p['wq'], p['wk'], p['wv']], axis=1)   # [D, 8D]
    b_all = jnp.concatenate([p['b1'], p['b2'], p['b3'], p['b4'], p['br'],
                             p['bq'], p['bk'], p['bv']], axis=1)   # [1, 8D]
    return dict(w_all=w_all, b_all=b_all,
                lnl_g=p['lnl_g'], lnl_b=p['lnl_b'],
                lna_g=p['lna_g'], lna_b=p['lna_b'],
                wo=p['wo'], bo=p['bo'],
                wf1=p['wf1'], bf1=p['bf1'], wf2=p['wf2'], bf2=p['bf2'])


def gps_layer_forward(x, edge_index, fp):
    args = (x, edge_index.astype(jnp.int32),
            fp['w_all'], fp['b_all'],
            fp['lnl_g'], fp['lnl_b'], fp['lna_g'], fp['lna_b'],
            fp['wo'], fp['bo'], fp['wf1'], fp['bf1'], fp['wf2'], fp['bf2'])
    in_specs = [pl.BlockSpec(memory_space=pltpu.MemorySpace.VMEM) for _ in args]
    # TODO(synk): for batched multi-graph workloads, add a "parallel" grid axis
    # over graphs so the second TensorCore on v7x is used.
    return pl.pallas_call(
        gps_kernel,
        out_shape=jax.ShapeDtypeStruct((N, D), jnp.float32),
        in_specs=in_specs,
        out_specs=pl.BlockSpec(memory_space=pltpu.MemorySpace.VMEM),
    )(*args)


def reference_forward(x, edge_index, p):
    """Pure-JAX reference (same math as the PyTorch module in eval mode)."""
    src, dst = edge_index[0], edge_index[1]
    h1 = x @ p['w1'] + p['b1']
    h2 = x @ p['w2'] + p['b2']
    h3 = x @ p['w3'] + p['b3']
    h4 = x @ p['w4'] + p['b4']
    res = x @ p['wr'] + p['br']
    z1 = jax.nn.sigmoid(h3[src] + h4[dst])
    he = z1 * h2[src]
    agg = jax.ops.segment_sum(he, dst, num_segments=N)
    cnt = jnp.maximum(jax.ops.segment_sum(jnp.ones((E,), jnp.float32), dst,
                                          num_segments=N), 1.0)[:, None]
    z = (h1 + agg) / cnt + res
    local = jnp.maximum(z, 0.0)
    local = _layer_norm(local, p['lnl_g'], p['lnl_b']) + x

    q = (x @ p['wq'] + p['bq']).reshape(N, H, HD).transpose(1, 0, 2)
    k = (x @ p['wk'] + p['bk']).reshape(N, H, HD).transpose(1, 0, 2)
    v = (x @ p['wv'] + p['bv']).reshape(N, H, HD).transpose(1, 0, 2)
    sc = jnp.einsum('hnd,hmd->hnm', q, k) / (float(HD) ** 0.5)
    pw = jax.nn.softmax(sc, axis=-1)
    oh = jnp.einsum('hnm,hmd->hnd', pw, v).transpose(1, 0, 2).reshape(N, D)
    attn = oh @ p['wo'] + p['bo']
    attn = jnp.maximum(attn, 0.0)
    attn = _layer_norm(attn, p['lna_g'], p['lna_b']) + x

    out = local + attn
    hff = jnp.maximum(out @ p['wf1'] + p['bf1'], 0.0)
    hff = hff @ p['wf2'] + p['bf2']
    y = out + hff
    return y / jnp.maximum(jnp.linalg.norm(y, axis=-1, keepdims=True), L2_EPS)


def init_params(key):
    def xavier(k, shape, gain=1.0):
        fi, fo = shape
        a = gain * (6.0 / (fi + fo)) ** 0.5
        return jax.random.uniform(k, shape, jnp.float32, -a, a)

    relu_gain = 2.0 ** 0.5
    ks = iter(jax.random.split(key, 16))
    p = {}
    # ResGatedGraphConv (xavier_uniform with relu gain, zero biases)
    for name in ('w1', 'w2', 'w3', 'w4', 'wr'):
        p[name] = xavier(next(ks), (D, D), relu_gain)
    for name in ('b1', 'b2', 'b3', 'b4', 'br'):
        p[name] = jnp.zeros((1, D), jnp.float32)
    # LayerNorms (PyTorch default)
    p['lnl_g'] = jnp.ones((1, D), jnp.float32)
    p['lnl_b'] = jnp.zeros((1, D), jnp.float32)
    p['lna_g'] = jnp.ones((1, D), jnp.float32)
    p['lna_b'] = jnp.zeros((1, D), jnp.float32)
    # MultiheadAttention projections
    p['wq'] = xavier(next(ks), (D, D))
    p['wk'] = xavier(next(ks), (D, D))
    p['wv'] = xavier(next(ks), (D, D))
    p['wo'] = xavier(next(ks), (D, D))
    p['bq'] = jnp.zeros((1, D), jnp.float32)
    p['bk'] = jnp.zeros((1, D), jnp.float32)
    p['bv'] = jnp.zeros((1, D), jnp.float32)
    p['bo'] = jnp.zeros((1, D), jnp.float32)
    # Feed-forward
    p['wf1'] = xavier(next(ks), (D, 2 * D))
    p['wf2'] = xavier(next(ks), (2 * D, D))
    p['bf1'] = jnp.zeros((1, 2 * D), jnp.float32)
    p['bf2'] = jnp.zeros((1, D), jnp.float32)
    return p


if __name__ == "__main__":
    key = jax.random.PRNGKey(0)
    k_x, k_e, k_p = jax.random.split(key, 3)
    x = jax.random.normal(k_x, (N, D), jnp.float32)
    edge_index = jax.random.randint(k_e, (2, E), 0, N, dtype=jnp.int32)
    params = init_params(k_p)
    fused = fuse_params(params)          # one-time glue, not in the hot path

    out = jax.block_until_ready(gps_layer_forward(x, edge_index, fused))
    ref = jax.block_until_ready(reference_forward(x, edge_index, params))

    assert out.shape == (N, D)
    assert bool(jnp.all(jnp.isfinite(out)))
    assert bool(jnp.allclose(out, ref, rtol=1e-4, atol=1e-5)), "mismatch vs reference"
    print("KERNEL_OK")
</pallas_src>

<mosaic_0001>
module attributes {stable_mosaic.version = 11 : i64} {
  func.func @gps_kernel(%arg0: memref<8x32xf32, #tpu.memory_space<vmem>>, %arg1: memref<2x16xi32, #tpu.memory_space<vmem>>, %arg2: memref<32x256xf32, #tpu.memory_space<vmem>>, %arg3: memref<1x256xf32, #tpu.memory_space<vmem>>, %arg4: memref<1x32xf32, #tpu.memory_space<vmem>>, %arg5: memref<1x32xf32, #tpu.memory_space<vmem>>, %arg6: memref<1x32xf32, #tpu.memory_space<vmem>>, %arg7: memref<1x32xf32, #tpu.memory_space<vmem>>, %arg8: memref<32x32xf32, #tpu.memory_space<vmem>>, %arg9: memref<1x32xf32, #tpu.memory_space<vmem>>, %arg10: memref<32x64xf32, #tpu.memory_space<vmem>>, %arg11: memref<1x64xf32, #tpu.memory_space<vmem>>, %arg12: memref<64x32xf32, #tpu.memory_space<vmem>>, %arg13: memref<1x32xf32, #tpu.memory_space<vmem>>, %arg14: memref<8x32xf32, #tpu.memory_space<vmem>>) attributes {dimension_semantics = [], scalar_prefetch = 0 : i64, scratch_operands = 0 : i64, tpu.core_type = #tpu.core_type<tc>} {
    %c0 = arith.constant 0 : index
    %c0_0 = arith.constant 0 : index
    %0 = vector.load %arg0[%c0, %c0_0] : memref<8x32xf32, #tpu.memory_space<vmem>>, vector<8x32xf32>
    %c0_1 = arith.constant 0 : index
    %c0_2 = arith.constant 0 : index
    %1 = vector.load %arg2[%c0_1, %c0_2] : memref<32x256xf32, #tpu.memory_space<vmem>>, vector<32x256xf32>
    %cst = arith.constant dense<0.000000e+00> : vector<8x256xf32>
    %2 = tpu.matmul %0, %1, %cst {dimension_numbers = #tpu.dot_dimension_numbers<[1], [0], [0], [1], [0, 0, 1, 1], [], []>} : vector<8x32xf32>, vector<32x256xf32>, vector<8x256xf32> -> vector<8x256xf32>
    %c0_3 = arith.constant 0 : index
    %c0_4 = arith.constant 0 : index
    %3 = vector.load %arg3[%c0_3, %c0_4] : memref<1x256xf32, #tpu.memory_space<vmem>>, vector<1x256xf32>
    %4 = vector.broadcast %3 : vector<1x256xf32> to vector<8x256xf32>
    %5 = arith.addf %2, %4 : vector<8x256xf32>
    %6 = vector.extract_strided_slice %5 {offsets = [0, 0], sizes = [8, 32], strides = [1, 1]} : vector<8x256xf32> to vector<8x32xf32>
    %7 = vector.extract_strided_slice %5 {offsets = [0, 32], sizes = [8, 64], strides = [1, 1]} : vector<8x256xf32> to vector<8x64xf32>
    %8 = vector.extract_strided_slice %5 {offsets = [0, 96], sizes = [8, 32], strides = [1, 1]} : vector<8x256xf32> to vector<8x32xf32>
    %9 = vector.extract_strided_slice %5 {offsets = [0, 128], sizes = [8, 32], strides = [1, 1]} : vector<8x256xf32> to vector<8x32xf32>
    %10 = vector.extract_strided_slice %5 {offsets = [0, 160], sizes = [8, 32], strides = [1, 1]} : vector<8x256xf32> to vector<8x32xf32>
    %cst_5 = arith.constant 0.353553385 : f32
    %11 = vector.broadcast %cst_5 : f32 to vector<8x32xf32>
    %12 = arith.mulf %10, %11 : vector<8x32xf32>
    %13 = vector.extract_strided_slice %5 {offsets = [0, 192], sizes = [8, 32], strides = [1, 1]} : vector<8x256xf32> to vector<8x32xf32>
    %14 = vector.extract_strided_slice %5 {offsets = [0, 224], sizes = [8, 32], strides = [1, 1]} : vector<8x256xf32> to vector<8x32xf32>
    %c0_6 = arith.constant 0 : index
    %c0_7 = arith.constant 0 : index
    %15 = vector.load %arg1[%c0_6, %c0_7] : memref<2x16xi32, #tpu.memory_space<vmem>>, vector<2x16xi32>
    %16 = tpu.iota {dimensions = array<i32: 0>} : vector<8x16xi32>
    %17 = vector.extract_strided_slice %15 {offsets = [0, 0], sizes = [1, 16], strides = [1, 1]} : vector<2x16xi32> to vector<1x16xi32>
    %18 = vector.broadcast %17 : vector<1x16xi32> to vector<8x16xi32>
    %19 = arith.cmpi eq, %16, %18 : vector<8x16xi32>
    %20 = arith.extui %19 : vector<8x16xi1> to vector<8x16xi32>
    %21 = arith.sitofp %20 : vector<8x16xi32> to vector<8x16xf32>
    %22 = vector.extract_strided_slice %15 {offsets = [1, 0], sizes = [1, 16], strides = [1, 1]} : vector<2x16xi32> to vector<1x16xi32>
    %23 = vector.broadcast %22 : vector<1x16xi32> to vector<8x16xi32>
    %24 = arith.cmpi eq, %16, %23 : vector<8x16xi32>
    %25 = arith.extui %24 : vector<8x16xi1> to vector<8x16xi32>
    %26 = arith.sitofp %25 : vector<8x16xi32> to vector<8x16xf32>
    %cst_8 = arith.constant dense<0.000000e+00> : vector<16x64xf32>
    %27 = tpu.matmul %21, %7, %cst_8 {dimension_numbers = #tpu.dot_dimension_numbers<[0], [0], [1], [1], [0, 1, 1, 1], [], []>} : vector<8x16xf32>, vector<8x64xf32>, vector<16x64xf32> -> vector<16x64xf32>
    %cst_9 = arith.constant dense<0.000000e+00> : vector<16x32xf32>
    %28 = tpu.matmul %26, %8, %cst_9 {dimension_numbers = #tpu.dot_dimension_numbers<[0], [0], [1], [1], [0, 1, 1, 1], [], []>} : vector<8x16xf32>, vector<8x32xf32>, vector<16x32xf32> -> vector<16x32xf32>
    %29 = vector.extract_strided_slice %27 {offsets = [0, 32], sizes = [16, 32], strides = [1, 1]} : vector<16x64xf32> to vector<16x32xf32>
    %30 = arith.addf %29, %28 : vector<16x32xf32>
    %31 = arith.negf %30 : vector<16x32xf32>
    %32 = math.exp %31 : vector<16x32xf32>
    %cst_10 = arith.constant 1.000000e+00 : f32
    %33 = vector.broadcast %cst_10 : f32 to vector<16x32xf32>
    %34 = arith.addf %33, %32 : vector<16x32xf32>
    %35 = arith.divf %33, %34 : vector<16x32xf32>
    %36 = vector.extract_strided_slice %27 {offsets = [0, 0], sizes = [16, 32], strides = [1, 1]} : vector<16x64xf32> to vector<16x32xf32>
    %37 = arith.mulf %35, %36 : vector<16x32xf32>
    %cst_11 = arith.constant dense<0.000000e+00> : vector<8x32xf32>
    %38 = tpu.matmul %26, %37, %cst_11 {dimension_numbers = #tpu.dot_dimension_numbers<[1], [0], [0], [1], [0, 0, 1, 1], [], []>} : vector<8x16xf32>, vector<16x32xf32>, vector<8x32xf32> -> vector<8x32xf32>
    %cst_12 = arith.constant dense<0.000000e+00> : vector<8xf32>
    %39 = vector.multi_reduction <add>, %26, %cst_12 [1] : vector<8x16xf32> to vector<8xf32>
    %40 = vector.shape_cast %39 : vector<8xf32> to vector<8x1xf32>
    %cst_13 = arith.constant 1.000000e+00 : f32
    %41 = vector.broadcast %cst_13 : f32 to vector<8x1xf32>
    %42 = arith.maximumf %40, %41 : vector<8x1xf32>
    %43 = arith.addf %6, %38 : vector<8x32xf32>
    %44 = vector.broadcast %42 : vector<8x1xf32> to vector<8x32xf32>
    %45 = arith.divf %43, %44 : vector<8x32xf32>
    %46 = arith.addf %45, %9 : vector<8x32xf32>
    %cst_14 = arith.constant 0.000000e+00 : f32
    %47 = vector.broadcast %cst_14 : f32 to vector<8x32xf32>
    %48 = arith.maximumf %46, %47 : vector<8x32xf32>
    %c0_15 = arith.constant 0 : index
    %c0_16 = arith.constant 0 : index
    %49 = vector.load %arg4[%c0_15, %c0_16] : memref<1x32xf32, #tpu.memory_space<vmem>>, vector<1x32xf32>
    %c0_17 = arith.constant 0 : index
    %c0_18 = arith.constant 0 : index
    %50 = vector.load %arg5[%c0_17, %c0_18] : memref<1x32xf32, #tpu.memory_space<vmem>>, vector<1x32xf32>
    %cst_19 = arith.constant dense<0.000000e+00> : vector<8xf32>
    %51 = vector.multi_reduction <add>, %48, %cst_19 [1] : vector<8x32xf32> to vector<8xf32>
    %52 = vector.shape_cast %51 : vector<8xf32> to vector<8x1xf32>
    %cst_20 = arith.constant 3.200000e+01 : f32
    %53 = vector.broadcast %cst_20 : f32 to vector<8x1xf32>
    %54 = arith.divf %52, %53 : vector<8x1xf32>
    %55 = vector.broadcast %54 : vector<8x1xf32> to vector<8x32xf32>
    %56 = arith.subf %48, %55 : vector<8x32xf32>
    %57 = arith.mulf %56, %56 : vector<8x32xf32>
    %cst_21 = arith.constant dense<0.000000e+00> : vector<8xf32>
    %58 = vector.multi_reduction <add>, %57, %cst_21 [1] : vector<8x32xf32> to vector<8xf32>
    %59 = vector.shape_cast %58 : vector<8xf32> to vector<8x1xf32>
    %cst_22 = arith.constant 3.200000e+01 : f32
    %60 = vector.broadcast %cst_22 : f32 to vector<8x1xf32>
    %61 = arith.divf %59, %60 : vector<8x1xf32>
    %62 = vector.broadcast %54 : vector<8x1xf32> to vector<8x32xf32>
    %63 = arith.subf %48, %62 : vector<8x32xf32>
    %cst_23 = arith.constant 9.99999974E-6 : f32
    %64 = vector.broadcast %cst_23 : f32 to vector<8x1xf32>
    %65 = arith.addf %61, %64 : vector<8x1xf32>
    %66 = math.rsqrt %65 : vector<8x1xf32>
    %67 = vector.broadcast %66 : vector<8x1xf32> to vector<8x32xf32>
    %68 = arith.mulf %63, %67 : vector<8x32xf32>
    %69 = vector.broadcast %49 : vector<1x32xf32> to vector<8x32xf32>
    %70 = arith.mulf %68, %69 : vector<8x32xf32>
    %71 = vector.broadcast %50 : vector<1x32xf32> to vector<8x32xf32>
    %72 = arith.addf %70, %71 : vector<8x32xf32>
    %73 = arith.addf %72, %0 : vector<8x32xf32>
    %74 = vector.extract_strided_slice %12 {offsets = [0, 0], sizes = [8, 8], strides = [1, 1]} : vector<8x32xf32> to vector<8x8xf32>
    %75 = vector.extract_strided_slice %13 {offsets = [0, 0], sizes = [8, 8], strides = [1, 1]} : vector<8x32xf32> to vector<8x8xf32>
    %cst_24 = arith.constant dense<0.000000e+00> : vector<8x8xf32>
    %76 = tpu.matmul %74, %75, %cst_24 {dimension_numbers = #tpu.dot_dimension_numbers<[1], [1], [0], [0], [0, 0, 1, 0], [], []>} : vector<8x8xf32>, vector<8x8xf32>, vector<8x8xf32> -> vector<8x8xf32>
    %77 = vector.extract_strided_slice %12 {offsets = [0, 8], sizes = [8, 8], strides = [1, 1]} : vector<8x32xf32> to vector<8x8xf32>
    %78 = vector.extract_strided_slice %13 {offsets = [0, 8], sizes = [8, 8], strides = [1, 1]} : vector<8x32xf32> to vector<8x8xf32>
    %cst_25 = arith.constant dense<0.000000e+00> : vector<8x8xf32>
    %79 = tpu.matmul %77, %78, %cst_25 {dimension_numbers = #tpu.dot_dimension_numbers<[1], [1], [0], [0], [0, 0, 1, 0], [], []>} : vector<8x8xf32>, vector<8x8xf32>, vector<8x8xf32> -> vector<8x8xf32>
    %80 = vector.extract_strided_slice %12 {offsets = [0, 16], sizes = [8, 8], strides = [1, 1]} : vector<8x32xf32> to vector<8x8xf32>
    %81 = vector.extract_strided_slice %13 {offsets = [0, 16], sizes = [8, 8], strides = [1, 1]} : vector<8x32xf32> to vector<8x8xf32>
    %cst_26 = arith.constant dense<0.000000e+00> : vector<8x8xf32>
    %82 = tpu.matmul %80, %81, %cst_26 {dimension_numbers = #tpu.dot_dimension_numbers<[1], [1], [0], [0], [0, 0, 1, 0], [], []>} : vector<8x8xf32>, vector<8x8xf32>, vector<8x8xf32> -> vector<8x8xf32>
    %83 = vector.extract_strided_slice %12 {offsets = [0, 24], sizes = [8, 8], strides = [1, 1]} : vector<8x32xf32> to vector<8x8xf32>
    %84 = vector.extract_strided_slice %13 {offsets = [0, 24], sizes = [8, 8], strides = [1, 1]} : vector<8x32xf32> to vector<8x8xf32>
    %cst_27 = arith.constant dense<0.000000e+00> : vector<8x8xf32>
    %85 = tpu.matmul %83, %84, %cst_27 {dimension_numbers = #tpu.dot_dimension_numbers<[1], [1], [0], [0], [0, 0, 1, 0], [], []>} : vector<8x8xf32>, vector<8x8xf32>, vector<8x8xf32> -> vector<8x8xf32>
    %86 = tpu.concatenate %76, %79, %82, %85 in 0 : vector<8x8xf32>, vector<8x8xf32>, vector<8x8xf32>, vector<8x8xf32> -> vector<32x8xf32>
    %cst_28 = arith.constant dense<0xFF800000> : vector<32xf32>
    %87 = vector.multi_reduction <maximumf>, %86, %cst_28 [1] : vector<32x8xf32> to vector<32xf32>
    %88 = vector.shape_cast %87 : vector<32xf32> to vector<32x1xf32>
    %89 = vector.broadcast %88 : vector<32x1xf32> to vector<32x8xf32>
    %90 = arith.subf %86, %89 : vector<32x8xf32>
    %91 = math.exp %90 : vector<32x8xf32>
    %cst_29 = arith.constant dense<0.000000e+00> : vector<32xf32>
    %92 = vector.multi_reduction <add>, %91, %cst_29 [1] : vector<32x8xf32> to vector<32xf32>
    %93 = vector.shape_cast %92 : vector<32xf32> to vector<32x1xf32>
    %94 = vector.broadcast %93 : vector<32x1xf32> to vector<32x8xf32>
    %95 = arith.divf %91, %94 : vector<32x8xf32>
    %96 = vector.extract_strided_slice %95 {offsets = [0, 0], sizes = [8, 8], strides = [1, 1]} : vector<32x8xf32> to vector<8x8xf32>
    %97 = vector.extract_strided_slice %14 {offsets = [0, 0], sizes = [8, 8], strides = [1, 1]} : vector<8x32xf32> to vector<8x8xf32>
    %cst_30 = arith.constant dense<0.000000e+00> : vector<8x8xf32>
    %98 = tpu.matmul %96, %97, %cst_30 {dimension_numbers = #tpu.dot_dimension_numbers<[1], [0], [0], [1], [0, 0, 1, 1], [], []>} : vector<8x8xf32>, vector<8x8xf32>, vector<8x8xf32> -> vector<8x8xf32>
    %99 = vector.extract_strided_slice %95 {offsets = [8, 0], sizes = [8, 8], strides = [1, 1]} : vector<32x8xf32> to vector<8x8xf32>
    %100 = vector.extract_strided_slice %14 {offsets = [0, 8], sizes = [8, 8], strides = [1, 1]} : vector<8x32xf32> to vector<8x8xf32>
    %cst_31 = arith.constant dense<0.000000e+00> : vector<8x8xf32>
    %101 = tpu.matmul %99, %100, %cst_31 {dimension_numbers = #tpu.dot_dimension_numbers<[1], [0], [0], [1], [0, 0, 1, 1], [], []>} : vector<8x8xf32>, vector<8x8xf32>, vector<8x8xf32> -> vector<8x8xf32>
    %102 = vector.extract_strided_slice %95 {offsets = [16, 0], sizes = [8, 8], strides = [1, 1]} : vector<32x8xf32> to vector<8x8xf32>
    %103 = vector.extract_strided_slice %14 {offsets = [0, 16], sizes = [8, 8], strides = [1, 1]} : vector<8x32xf32> to vector<8x8xf32>
    %cst_32 = arith.constant dense<0.000000e+00> : vector<8x8xf32>
    %104 = tpu.matmul %102, %103, %cst_32 {dimension_numbers = #tpu.dot_dimension_numbers<[1], [0], [0], [1], [0, 0, 1, 1], [], []>} : vector<8x8xf32>, vector<8x8xf32>, vector<8x8xf32> -> vector<8x8xf32>
    %105 = vector.extract_strided_slice %95 {offsets = [24, 0], sizes = [8, 8], strides = [1, 1]} : vector<32x8xf32> to vector<8x8xf32>
    %106 = vector.extract_strided_slice %14 {offsets = [0, 24], sizes = [8, 8], strides = [1, 1]} : vector<8x32xf32> to vector<8x8xf32>
    %cst_33 = arith.constant dense<0.000000e+00> : vector<8x8xf32>
    %107 = tpu.matmul %105, %106, %cst_33 {dimension_numbers = #tpu.dot_dimension_numbers<[1], [0], [0], [1], [0, 0, 1, 1], [], []>} : vector<8x8xf32>, vector<8x8xf32>, vector<8x8xf32> -> vector<8x8xf32>
    %108 = tpu.concatenate %98, %101, %104, %107 in 1 : vector<8x8xf32>, vector<8x8xf32>, vector<8x8xf32>, vector<8x8xf32> -> vector<8x32xf32>
    %c0_34 = arith.constant 0 : index
    %c0_35 = arith.constant 0 : index
    %109 = vector.load %arg8[%c0_34, %c0_35] : memref<32x32xf32, #tpu.memory_space<vmem>>, vector<32x32xf32>
    %cst_36 = arith.constant dense<0.000000e+00> : vector<8x32xf32>
    %110 = tpu.matmul %108, %109, %cst_36 {dimension_numbers = #tpu.dot_dimension_numbers<[1], [0], [0], [1], [0, 0, 1, 1], [], []>} : vector<8x32xf32>, vector<32x32xf32>, vector<8x32xf32> -> vector<8x32xf32>
    %c0_37 = arith.constant 0 : index
    %c0_38 = arith.constant 0 : index
    %111 = vector.load %arg9[%c0_37, %c0_38] : memref<1x32xf32, #tpu.memory_space<vmem>>, vector<1x32xf32>
    %112 = vector.broadcast %111 : vector<1x32xf32> to vector<8x32xf32>
    %113 = arith.addf %110, %112 : vector<8x32xf32>
    %cst_39 = arith.constant 0.000000e+00 : f32
    %114 = vector.broadcast %cst_39 : f32 to vector<8x32xf32>
    %115 = arith.maximumf %113, %114 : vector<8x32xf32>
    %c0_40 = arith.constant 0 : index
    %c0_41 = arith.constant 0 : index
    %116 = vector.load %arg6[%c0_40, %c0_41] : memref<1x32xf32, #tpu.memory_space<vmem>>, vector<1x32xf32>
    %c0_42 = arith.constant 0 : index
    %c0_43 = arith.constant 0 : index
    %117 = vector.load %arg7[%c0_42, %c0_43] : memref<1x32xf32, #tpu.memory_space<vmem>>, vector<1x32xf32>
    %cst_44 = arith.constant dense<0.000000e+00> : vector<8xf32>
    %118 = vector.multi_reduction <add>, %115, %cst_44 [1] : vector<8x32xf32> to vector<8xf32>
    %119 = vector.shape_cast %118 : vector<8xf32> to vector<8x1xf32>
    %cst_45 = arith.constant 3.200000e+01 : f32
    %120 = vector.broadcast %cst_45 : f32 to vector<8x1xf32>
    %121 = arith.divf %119, %120 : vector<8x1xf32>
    %122 = vector.broadcast %121 : vector<8x1xf32> to vector<8x32xf32>
    %123 = arith.subf %115, %122 : vector<8x32xf32>
    %124 = arith.mulf %123, %123 : vector<8x32xf32>
    %cst_46 = arith.constant dense<0.000000e+00> : vector<8xf32>
    %125 = vector.multi_reduction <add>, %124, %cst_46 [1] : vector<8x32xf32> to vector<8xf32>
    %126 = vector.shape_cast %125 : vector<8xf32> to vector<8x1xf32>
    %cst_47 = arith.constant 3.200000e+01 : f32
    %127 = vector.broadcast %cst_47 : f32 to vector<8x1xf32>
    %128 = arith.divf %126, %127 : vector<8x1xf32>
    %129 = vector.broadcast %121 : vector<8x1xf32> to vector<8x32xf32>
    %130 = arith.subf %115, %129 : vector<8x32xf32>
    %cst_48 = arith.constant 9.99999974E-6 : f32
    %131 = vector.broadcast %cst_48 : f32 to vector<8x1xf32>
    %132 = arith.addf %128, %131 : vector<8x1xf32>
    %133 = math.rsqrt %132 : vector<8x1xf32>
    %134 = vector.broadcast %133 : vector<8x1xf32> to vector<8x32xf32>
    %135 = arith.mulf %130, %134 : vector<8x32xf32>
    %136 = vector.broadcast %116 : vector<1x32xf32> to vector<8x32xf32>
    %137 = arith.mulf %135, %136 : vector<8x32xf32>
    %138 = vector.broadcast %117 : vector<1x32xf32> to vector<8x32xf32>
    %139 = arith.addf %137, %138 : vector<8x32xf32>
    %140 = arith.addf %139, %0 : vector<8x32xf32>
    %141 = arith.addf %73, %140 : vector<8x32xf32>
    %c0_49 = arith.constant 0 : index
    %c0_50 = arith.constant 0 : index
    %142 = vector.load %arg10[%c0_49, %c0_50] : memref<32x64xf32, #tpu.memory_space<vmem>>, vector<32x64xf32>
    %cst_51 = arith.constant dense<0.000000e+00> : vector<8x64xf32>
    %143 = tpu.matmul %141, %142, %cst_51 {dimension_numbers = #tpu.dot_dimension_numbers<[1], [0], [0], [1], [0, 0, 1, 1], [], []>} : vector<8x32xf32>, vector<32x64xf32>, vector<8x64xf32> -> vector<8x64xf32>
    %c0_52 = arith.constant 0 : index
    %c0_53 = arith.constant 0 : index
    %144 = vector.load %arg11[%c0_52, %c0_53] : memref<1x64xf32, #tpu.memory_space<vmem>>, vector<1x64xf32>
    %145 = vector.broadcast %144 : vector<1x64xf32> to vector<8x64xf32>
    %146 = arith.addf %143, %145 : vector<8x64xf32>
    %cst_54 = arith.constant 0.000000e+00 : f32
    %147 = vector.broadcast %cst_54 : f32 to vector<8x64xf32>
    %148 = arith.maximumf %146, %147 : vector<8x64xf32>
    %c0_55 = arith.constant 0 : index
    %c0_56 = arith.constant 0 : index
    %149 = vector.load %arg12[%c0_55, %c0_56] : memref<64x32xf32, #tpu.memory_space<vmem>>, vector<64x32xf32>
    %cst_57 = arith.constant dense<0.000000e+00> : vector<8x32xf32>
    %150 = tpu.matmul %148, %149, %cst_57 {dimension_numbers = #tpu.dot_dimension_numbers<[1], [0], [0], [1], [0, 0, 1, 1], [], []>} : vector<8x64xf32>, vector<64x32xf32>, vector<8x32xf32> -> vector<8x32xf32>
    %c0_58 = arith.constant 0 : index
    %c0_59 = arith.constant 0 : index
    %151 = vector.load %arg13[%c0_58, %c0_59] : memref<1x32xf32, #tpu.memory_space<vmem>>, vector<1x32xf32>
    %152 = vector.broadcast %151 : vector<1x32xf32> to vector<8x32xf32>
    %153 = arith.addf %150, %152 : vector<8x32xf32>
    %154 = arith.addf %141, %153 : vector<8x32xf32>
    %155 = arith.mulf %154, %154 : vector<8x32xf32>
    %cst_60 = arith.constant dense<0.000000e+00> : vector<8xf32>
    %156 = vector.multi_reduction <add>, %155, %cst_60 [1] : vector<8x32xf32> to vector<8xf32>
    %157 = vector.shape_cast %156 : vector<8xf32> to vector<8x1xf32>
    %158 = math.sqrt %157 : vector<8x1xf32>
    %cst_61 = arith.constant 9.99999996E-13 : f32
    %159 = vector.broadcast %cst_61 : f32 to vector<8x1xf32>
    %160 = arith.maximumf %158, %159 : vector<8x1xf32>
    %161 = vector.broadcast %160 : vector<8x1xf32> to vector<8x32xf32>
    %162 = arith.divf %154, %161 : vector<8x32xf32>
    %c0_62 = arith.constant 0 : index
    %c0_63 = arith.constant 0 : index
    %163 = vector.load %arg14[%c0_62, %c0_63] : memref<8x32xf32, #tpu.memory_space<vmem>>, vector<8x32xf32>
    tpu.vector_store %arg14[%c0_62, %c0_63], %162 {strides = array<i32>} : memref<8x32xf32, #tpu.memory_space<vmem>>, vector<8x32xf32>,
    return
  }
}

</mosaic_0001>

<llo_original>
// kernel: tpu_custom_call.1
$region0: #{tpu_custom_call.1}
  #allocation0 [shape = 'u32[]', space=smem, size = 0x4, offset = 0x4, fixed_abs, tag = 'smem constant byte address 0x4 - core index']
  #allocation1 [shape = 'u32[72,128]{1,0:T(1,128)}', space=vmem, size = 0x9000, scoped, tag = 'internal scratch']
  %s0 = inlined_call_operand.hbm [shape: f32[8,32], index: 0, kind: input, shape index: {}]
  %s1 = inlined_call_operand.hbm [shape: s32[2,16], index: 1, kind: input, shape index: {}]
  %s2 = inlined_call_operand.vmem [shape: f32[32,256], index: 2, kind: input, shape index: {}]
  %s3 = inlined_call_operand.hbm [shape: f32[1,256], index: 3, kind: input, shape index: {}]
  %s4 = inlined_call_operand.vmem [shape: f32[1,32], index: 4, kind: input, shape index: {}]
  %s5 = inlined_call_operand.vmem [shape: f32[1,32], index: 5, kind: input, shape index: {}]
  %s6 = inlined_call_operand.vmem [shape: f32[1,32], index: 6, kind: input, shape index: {}]
  %s7 = inlined_call_operand.vmem [shape: f32[1,32], index: 7, kind: input, shape index: {}]
  %s8 = inlined_call_operand.vmem [shape: f32[32,32], index: 8, kind: input, shape index: {}]
  %s9 = inlined_call_operand.vmem [shape: f32[1,32], index: 9, kind: input, shape index: {}]
  %s10 = inlined_call_operand.hbm [shape: f32[32,64], index: 10, kind: input, shape index: {}]
  %s11 = inlined_call_operand.vmem [shape: f32[1,64], index: 11, kind: input, shape index: {}]
  %s12 = inlined_call_operand.vmem [shape: f32[64,32], index: 12, kind: input, shape index: {}]
  %s13 = inlined_call_operand.vmem [shape: f32[1,32], index: 13, kind: input, shape index: {}]
  %s14 = inlined_call_operand.hbm [shape: f32[8,32], index: 14, kind: output, shape index: {}]
  %s15 = sld [smem:[#allocation0]]
  $region82: #{tpu_custom_call.1} parent=0
    _
  %s17 = ssub.s32 1, %s15
  %s18 = scalar_select 0, %s17, %s15
  $region1: #{tpu_custom_call.1} parent=0
    #allocation2 [shape = 'u8[4096]{0}', space=vmem, size = 0x1000, scoped, tag = 'input window, operand 0, single buffered']
    #allocation3 [shape = 's32[1]{0}', space=sflag, size = 0x4, scoped, tag = 'scoped memory for tpu_custom_call.1']
    #allocation4 [shape = 's32[1]{0}', space=sflag, size = 0x4, scoped, tag = 'scoped memory for tpu_custom_call.1']
    #allocation5 [shape = 'u8[1024]{0}', space=vmem, size = 0x400, scoped, tag = 'input window, operand 1, single buffered']
    #allocation6 [shape = 's32[1]{0}', space=sflag, size = 0x4, scoped, tag = 'scoped memory for tpu_custom_call.1']
    #allocation7 [shape = 'u8[1024]{0}', space=vmem, size = 0x400, scoped, tag = 'input window, operand 3, single buffered']
    #allocation8 [shape = 'u8[16384]{0}', space=vmem, size = 0x4000, scoped, tag = 'input window, operand 10, single buffered']
    #allocation9 [shape = 's32[1]{0}', space=sflag, size = 0x4, scoped, tag = 'scoped memory for tpu_custom_call.1']
    #allocation10 [shape = 'u8[4096]{0}', space=vmem, size = 0x1000, scoped, tag = 'output window, operand 0, single buffered']
    %19 = vsyncpa [#allocation3], 0
    %20 = vsyncpa [#allocation6], 0
    %21 = vsyncpa [#allocation9], 0
    %22 = vsyncpa [#allocation4], 0
    // Predicated region
    $region2: #{tpu_custom_call.1} parent=1 // pred_check
      _
    $region3: #{tpu_custom_call.1} parent=1 // pred_check_branch
      %24 = sbr.rel (0) target = $region5
    $region4: #{tpu_custom_call.1} parent=1 // pred_region
      %26 = vsyncadd [#allocation3], 0
      %s28 = sshll.u32 %s0, 4
      %s29 = int_to_ptr.hbm [resolvable:$true] %s28
      %s30 = sshll.u32 [#allocation2], 4
      %s31 = int_to_ptr.vmem [resolvable:$true] %s30
      %33 = dma.hbm_to_vmem [thread:$0]  %s29, 128, %s31, [#allocation3]
    $region5: #{tpu_custom_call.1} parent=1 // pred_fallthru
      _
    // Predicated region
    $region6: #{tpu_custom_call.1} parent=1 // pred_check
      _
    $region7: #{tpu_custom_call.1} parent=1 // pred_check_branch
      %35 = sbr.rel (0) target = $region9
    $region8: #{tpu_custom_call.1} parent=1 // pred_region
      %37 = vsyncadd [#allocation6], 0
      %s39 = sshll.u32 %s1, 4
      %s40 = int_to_ptr.hbm [resolvable:$true] %s39
      %s41 = sshll.u32 [#allocation5], 4
      %s42 = int_to_ptr.vmem [resolvable:$true] %s41
      %44 = dma.hbm_to_vmem [thread:$0]  %s40, 32, %s42, [#allocation6]
    $region9: #{tpu_custom_call.1} parent=1 // pred_fallthru
      _
    // Predicated region
    $region10: #{tpu_custom_call.1} parent=1 // pred_check
      _
    $region11: #{tpu_custom_call.1} parent=1 // pred_check_branch
      %46 = sbr.rel (0) target = $region13
    $region12: #{tpu_custom_call.1} parent=1 // pred_region
      _
    $region13: #{tpu_custom_call.1} parent=1 // pred_fallthru
      _
    // Predicated region
    $region14: #{tpu_custom_call.1} parent=1 // pred_check
      _
    $region15: #{tpu_custom_call.1} parent=1 // pred_check_branch
      %48 = sbr.rel (0) target = $region17
    $region16: #{tpu_custom_call.1} parent=1 // pred_region
      %50 = vsyncadd [#allocation6], 0
      %s52 = sshll.u32 %s3, 4
      %s53 = int_to_ptr.hbm [resolvable:$true] %s52
      %s54 = sshll.u32 [#allocation7], 4
      %s55 = int_to_ptr.vmem [resolvable:$true] %s54
      %57 = dma.hbm_to_vmem [thread:$0]  %s53, 32, %s55, [#allocation6]
    $region17: #{tpu_custom_call.1} parent=1 // pred_fallthru
      _
    // Predicated region
    $region18: #{tpu_custom_call.1} parent=1 // pred_check
      _
    $region19: #{tpu_custom_call.1} parent=1 // pred_check_branch
      %59 = sbr.rel (0) target = $region21
    $region20: #{tpu_custom_call.1} parent=1 // pred_region
      _
    $region21: #{tpu_custom_call.1} parent=1 // pred_fallthru
      _
    // Predicated region
    $region22: #{tpu_custom_call.1} parent=1 // pred_check
      _
    $region23: #{tpu_custom_call.1} parent=1 // pred_check_branch
      %61 = sbr.rel (0) target = $region25
    $region24: #{tpu_custom_call.1} parent=1 // pred_region
      _
    $region25: #{tpu_custom_call.1} parent=1 // pred_fallthru
      _
    // Predicated region
    $region26: #{tpu_custom_call.1} parent=1 // pred_check
      _
    $region27: #{tpu_custom_call.1} parent=1 // pred_check_branch
      %63 = sbr.rel (0) target = $region29
    $region28: #{tpu_custom_call.1} parent=1 // pred_region
      _
    $region29: #{tpu_custom_call.1} parent=1 // pred_fallthru
      _
    // Predicated region
    $region30: #{tpu_custom_call.1} parent=1 // pred_check
      _
    $region31: #{tpu_custom_call.1} parent=1 // pred_check_branch
      %65 = sbr.rel (0) target = $region33
    $region32: #{tpu_custom_call.1} parent=1 // pred_region
      _
    $region33: #{tpu_custom_call.1} parent=1 // pred_fallthru
      _
    // Predicated region
    $region34: #{tpu_custom_call.1} parent=1 // pred_check
      _
    $region35: #{tpu_custom_call.1} parent=1 // pred_check_branch
      %67 = sbr.rel (0) target = $region37
    $region36: #{tpu_custom_call.1} parent=1 // pred_region
      _
    $region37: #{tpu_custom_call.1} parent=1 // pred_fallthru
      _
    // Predicated region
    $region38: #{tpu_custom_call.1} parent=1 // pred_check
      _
    $region39: #{tpu_custom_call.1} parent=1 // pred_check_branch
      %69 = sbr.rel (0) target = $region41
    $region40: #{tpu_custom_call.1} parent=1 // pred_region
      _
    $region41: #{tpu_custom_call.1} parent=1 // pred_fallthru
      _
    // Predicated region
    $region42: #{tpu_custom_call.1} parent=1 // pred_check
      _
    $region43: #{tpu_custom_call.1} parent=1 // pred_check_branch
      %71 = sbr.rel (0) target = $region45
    $region44: #{tpu_custom_call.1} parent=1 // pred_region
      %73 = vsyncadd [#allocation9], 0
      %s74 = sshll.u32 %s10, 4
      %s75 = int_to_ptr.hbm [resolvable:$true] %s74
      %s76 = sshll.u32 [#allocation8], 4
      %s77 = int_to_ptr.vmem [resolvable:$true] %s76
      %82 = dma.hbm_to_vmem [thread:$0]  %s75, 512, %s77, [#allocation9], 128, 128, 8
    $region45: #{tpu_custom_call.1} parent=1 // pred_fallthru
      _
    // Predicated region
    $region46: #{tpu_custom_call.1} parent=1 // pred_check
      _
    $region47: #{tpu_custom_call.1} parent=1 // pred_check_branch
      %84 = sbr.rel (0) target = $region49
    $region48: #{tpu_custom_call.1} parent=1 // pred_region
      _
    $region49: #{tpu_custom_call.1} parent=1 // pred_fallthru
      _
    // Predicated region
    $region50: #{tpu_custom_call.1} parent=1 // pred_check
      _
    $region51: #{tpu_custom_call.1} parent=1 // pred_check_branch
      %86 = sbr.rel (0) target = $region53
    $region52: #{tpu_custom_call.1} parent=1 // pred_region
      _
    $region53: #{tpu_custom_call.1} parent=1 // pred_fallthru
      _
    // Predicated region
    $region54: #{tpu_custom_call.1} parent=1 // pred_check
      _
    $region55: #{tpu_custom_call.1} parent=1 // pred_check_branch
      %88 = sbr.rel (0) target = $region57
    $region56: #{tpu_custom_call.1} parent=1 // pred_region
      _
    $region57: #{tpu_custom_call.1} parent=1 // pred_fallthru
      _
    // Predicated region
    $region58: #{tpu_custom_call.1} parent=1 // pred_check
      _
    $region59: #{tpu_custom_call.1} parent=1 // pred_check_branch
      %90 = sbr.rel (0) target = $region61
    $region60: #{tpu_custom_call.1} parent=1 // pred_region
      %92 = dma.done [#allocation3], 128
    $region61: #{tpu_custom_call.1} parent=1 // pred_fallthru
      _
    // Predicated region
    $region62: #{tpu_custom_call.1} parent=1 // pred_check
      _
    $region63: #{tpu_custom_call.1} parent=1 // pred_check_branch
      %94 = sbr.rel (0) target = $region65
    $region64: #{tpu_custom_call.1} parent=1 // pred_region
      %96 = dma.done [#allocation6], 32
    $region65: #{tpu_custom_call.1} parent=1 // pred_fallthru
      _
    // Predicated region
    $region66: #{tpu_custom_call.1} parent=1 // pred_check
      _
    $region67: #{tpu_custom_call.1} parent=1 // pred_check_branch
      %98 = sbr.rel (0) target = $region69
    $region68: #{tpu_custom_call.1} parent=1 // pred_region
      %100 = dma.done [#allocation6], 32
    $region69: #{tpu_custom_call.1} parent=1 // pred_fallthru
      _
    // Predicated region
    $region70: #{tpu_custom_call.1} parent=1 // pred_check
      _
    $region71: #{tpu_custom_call.1} parent=1 // pred_check_branch
      %102 = sbr.rel (0) target = $region73
    $region72: #{tpu_custom_call.1} parent=1 // pred_region
      %104 = dma.done [#allocation9], 512
    $region73: #{tpu_custom_call.1} parent=1 // pred_fallthru
      _
    %v105 = vld [vmem:[#allocation2] sm:$0xff]
    %v106 = vld [vmem:[%s2] sm:$0xff]
    %v107 = vld [vmem:[%s2 + $0x8] sm:$0xff]
    %v108 = vld [vmem:[%s2 + $0x10] sm:$0xff]
    %v109 = vld [vmem:[%s2 + $0x18] sm:$0xff]
    %v110 = vld [vmem:[%s2 + $0x20] sm:$0xff]
    %v111 = vld [vmem:[%s2 + $0x28] sm:$0xff]
    %v112 = vld [vmem:[%s2 + $0x30] sm:$0xff]
    %v113 = vld [vmem:[%s2 + $0x38] sm:$0xff]
    %v114 = vld [vmem:[#allocation7] sm:$0x3]
    %v116 = vperm.slane %v114, 0
    %v117 = vperm.slane %v114, 1
    %vm120 = vcmask 261120
    %v122 = vsel %vm120, %v105, 0
    %124 = vmatpush.msra.mxu0 0.0
    %125 = vmatpush.msra.mxu0 0.0
    %126 = vmatpush.msra.mxu0 0.0
    %127 = vmatpush.msra.mxu0 0.0
    %128 = vmatpush.msra.mxu0 0.0
    %129 = vmatpush.msra.mxu0 0.0
    %130 = vmatpush.msra.mxu0 0.0
    %131 = vmatpush.msra.mxu0 0.0
    %132 = vmatpush.msra.mxu0 0.0
    %133 = vmatpush.msra.mxu0 0.0
    %134 = vmatpush.msra.mxu0 0.0
    %135 = vmatpush.msra.mxu0 0.0
    %136 = vmatpush.msra.mxu0 %v112
    %137 = vmatpush.msra.mxu0 %v110
    %138 = vmatpush.msra.mxu0 %v108
    %139 = vmatpush.msra.mxu0 %v106
    %140 = vmatmul.f32.gmra.mxu0 %v122
    %v141 = vpop.f32.mrf.mxu0
    %v142 = vadd.f32 %v116, %v141
    %143 = vdwg.mxu0
    %144 = vmatpush.msra.mxu0 0.0
    %145 = vmatpush.msra.mxu0 0.0
    %146 = vmatpush.msra.mxu0 0.0
    %147 = vmatpush.msra.mxu0 0.0
    %148 = vmatpush.msra.mxu0 0.0
    %149 = vmatpush.msra.mxu0 0.0
    %150 = vmatpush.msra.mxu0 0.0
    %151 = vmatpush.msra.mxu0 0.0
    %152 = vmatpush.msra.mxu0 0.0
    %153 = vmatpush.msra.mxu0 0.0
    %154 = vmatpush.msra.mxu0 0.0
    %155 = vmatpush.msra.mxu0 0.0
    %156 = vmatpush.msra.mxu0 %v113
    %157 = vmatpush.msra.mxu0 %v111
    %158 = vmatpush.msra.mxu0 %v109
    %159 = vmatpush.msra.mxu0 %v107
    %160 = vmatmul.f32.gmra.mxu0 %v122
    %v161 = vpop.f32.mrf.mxu0
    %v162 = vadd.f32 %v117, %v161
    %163 = vdwg.mxu0
    %v164 = vmul.f32 %v162, 0.35355338
    %v165 = vld [vmem:[#allocation5] sm:$0x3]
    %v166 = vlaneseq
    %v167 = vshrl.u32 %v166, 7
    %v168 = vperm.slane %v165, 0
    %vm169 = vcmp.eq.s32.totalorder %v167, %v168
    %v170 = vsel %vm169, 1, 0
    %v171 = vcvt.s32.f32 %v170
    %v172 = vperm.slane %v165, 1
    %vm173 = vcmp.eq.s32.totalorder %v167, %v172
    %v174 = vsel %vm173, 1, 0
    %v175 = vcvt.s32.f32 %v174
    %176 = vxpose.xlu0.b32.start [1/16] %v171, 128
    %177 = vxpose.xlu0.b32.cont [2/16] 0.0, 128
    %178 = vxpose.xlu0.b32.cont [3/16] 0.0, 128
    %179 = vxpose.xlu0.b32.cont [4/16] 0.0, 128
    %180 = vxpose.xlu0.b32.cont [5/16] 0.0, 128
    %181 = vxpose.xlu0.b32.cont [6/16] 0.0, 128
    %182 = vxpose.xlu0.b32.cont [7/16] 0.0, 128
    %183 = vxpose.xlu0.b32.cont [8/16] 0.0, 128
    %184 = vxpose.xlu0.b32.cont [9/16] 0.0, 128
    %185 = vxpose.xlu0.b32.cont [10/16] 0.0, 128
    %186 = vxpose.xlu0.b32.cont [11/16] 0.0, 128
    %187 = vxpose.xlu0.b32.cont [12/16] 0.0, 128
    %188 = vxpose.xlu0.b32.cont [13/16] 0.0, 128
    %189 = vxpose.xlu0.b32.cont [14/16] 0.0, 128
    %190 = vxpose.xlu0.b32.cont [15/16] 0.0, 128
    %191 = vxpose.xlu0.b32.end [16/16] 0.0, 128
    %v192 = vpop.trf.xlu0
    %v193 = vpop.trf.xlu0
    %v194 = vpop.trf.xlu0
    %v195 = vpop.trf.xlu0
    %v196 = vpop.trf.xlu0
    %v197 = vpop.trf.xlu0
    %v198 = vpop.trf.xlu0
    %v199 = vpop.trf.xlu0
    %v200 = vpop.trf.xlu0
    %v201 = vpop.trf.xlu0
    %v202 = vpop.trf.xlu0
    %v203 = vpop.trf.xlu0
    %v204 = vpop.trf.xlu0
    %v205 = vpop.trf.xlu0
    %v206 = vpop.trf.xlu0
    %v207 = vpop.trf.xlu0
    %209 = vrot.lane.b32.xlu0 %v142, 96
    %v210 = vpop.permute.xlu0 %209
    %vm212 = vcmask 64512
    %v214 = vsel %vm212, %v192, 0
    %v217 = vsel %vm212, %v193, 0
    %219 = vmatpush.msra.mxu0 0.0
    %220 = vmatpush.msra.mxu0 0.0
    %221 = vmatpush.msra.mxu0 0.0
    %222 = vmatpush.msra.mxu0 0.0
    %223 = vmatpush.msra.mxu0 0.0
    %224 = vmatpush.msra.mxu0 0.0
    %225 = vmatpush.msra.mxu0 0.0
    %226 = vmatpush.msra.mxu0 0.0
    %227 = vmatpush.msra.mxu0 0.0
    %228 = vmatpush.msra.mxu0 0.0
    %229 = vmatpush.msra.mxu0 0.0
    %230 = vmatpush.msra.mxu0 0.0
    %231 = vmatpush.msra.mxu0 0.0
    %232 = vmatpush.msra.mxu0 0.0
    %233 = vmatpush.msra.mxu0 0.0
    %234 = vmatpush.msra.mxu0 %v210
    %235 = vmatmul.f32.gmra.mxu0 %v214
    %v236 = vpop.f32.mrf.mxu0
    %v237 = vadd.f32 0.0, %v236
    %238 = vmatmul.f32.gmra.mxu0 %v217
    %v239 = vpop.f32.mrf.mxu0
    %v240 = vadd.f32 0.0, %v239
    %241 = vdwg.mxu0
    %242 = vxpose.xlu0.b32.start [1/16] %v175, 128
    %243 = vxpose.xlu0.b32.cont [2/16] 0.0, 128
    %244 = vxpose.xlu0.b32.cont [3/16] 0.0, 128
    %245 = vxpose.xlu0.b32.cont [4/16] 0.0, 128
    %246 = vxpose.xlu0.b32.cont [5/16] 0.0, 128
    %247 = vxpose.xlu0.b32.cont [6/16] 0.0, 128
    %248 = vxpose.xlu0.b32.cont [7/16] 0.0, 128
    %249 = vxpose.xlu0.b32.cont [8/16] 0.0, 128
    %250 = vxpose.xlu0.b32.cont [9/16] 0.0, 128
    %251 = vxpose.xlu0.b32.cont [10/16] 0.0, 128
    %252 = vxpose.xlu0.b32.cont [11/16] 0.0, 128
    %253 = vxpose.xlu0.b32.cont [12/16] 0.0, 128
    %254 = vxpose.xlu0.b32.cont [13/16] 0.0, 128
    %255 = vxpose.xlu0.b32.cont [14/16] 0.0, 128
    %256 = vxpose.xlu0.b32.cont [15/16] 0.0, 128
    %257 = vxpose.xlu0.b32.end [16/16] 0.0, 128
    %v258 = vpop.trf.xlu0
    %v259 = vpop.trf.xlu0
    %v260 = vpop.trf.xlu0
    %v261 = vpop.trf.xlu0
    %v262 = vpop.trf.xlu0
    %v263 = vpop.trf.xlu0
    %v264 = vpop.trf.xlu0
    %v265 = vpop.trf.xlu0
    %v266 = vpop.trf.xlu0
    %v267 = vpop.trf.xlu0
    %v268 = vpop.trf.xlu0
    %v269 = vpop.trf.xlu0
    %v270 = vpop.trf.xlu0
    %v271 = vpop.trf.xlu0
    %v272 = vpop.trf.xlu0
    %v273 = vpop.trf.xlu0
    %274 = vrot.lane.b32.xlu0 %v142, 32
    %v275 = vpop.permute.xlu0 %274
    %v278 = vsel %vm212, %v258, 0
    %v281 = vsel %vm212, %v259, 0
    %283 = vmatpush.msra.mxu0 0.0
    %284 = vmatpush.msra.mxu0 0.0
    %285 = vmatpush.msra.mxu0 0.0
    %286 = vmatpush.msra.mxu0 0.0
    %287 = vmatpush.msra.mxu0 0.0
    %288 = vmatpush.msra.mxu0 0.0
    %289 = vmatpush.msra.mxu0 0.0
    %290 = vmatpush.msra.mxu0 0.0
    %291 = vmatpush.msra.mxu0 0.0
    %292 = vmatpush.msra.mxu0 0.0
    %293 = vmatpush.msra.mxu0 0.0
    %294 = vmatpush.msra.mxu0 0.0
    %295 = vmatpush.msra.mxu0 0.0
    %296 = vmatpush.msra.mxu0 0.0
    %297 = vmatpush.msra.mxu0 0.0
    %298 = vmatpush.msra.mxu0 %v275
    %299 = vmatmul.f32.gmra.mxu0 %v278
    %v300 = vpop.f32.mrf.mxu0
    %v301 = vadd.f32 0.0, %v300
    %302 = vmatmul.f32.gmra.mxu0 %v281
    %v303 = vpop.f32.mrf.mxu0
    %v304 = vadd.f32 0.0, %v303
    %305 = vdwg.mxu0
    %308 = vrot.lane.b32.xlu0 %v301, 32
    %v309 = vpop.permute.xlu0 %308
    %310 = vrot.lane.b32.xlu0 %v304, 32
    %v311 = vpop.permute.xlu0 %310
    %v314 = vadd.f32 %v237, %v309
    %v315 = vadd.f32 %v240, %v311
    %v316 = vxor.u32 %v314, 2147483648
    %v317 = vxor.u32 %v315, 2147483648
    %v318 = vmul.f32 %v316, 1.442695
    %v319 = vpow.pop %v318
    %v320 = vmul.f32 %v317, 1.442695
    %v321 = vpow.pop %v320
    %v322 = vadd.f32 %v319, 1.0
    %v323 = vadd.f32 %v321, 1.0
    %v324 = vrcp.pop %v322
    %v325 = vmul.f32 %v322, %v324
    %v326 = vsub.f32 1.0, %v325
    %v327 = vmul.f32 %v324, %v326
    %v328 = vadd.f32 %v324, %v327
    %vm329 = vweird.f32 %v322
    %vm330 = vweird.f32 %v324
    %vm331 = vmor %vm329, %vm330
    %v332 = vsel %vm331, %v324, %v328
    %v333 = vand.u32 2147483647, %v322
    %vm334 = vcmp.eq.f32.partialorder %v333, 8.507059e+37
    %v335 = vand.u32 %v322, 2147483648
    %v336 = vor.u32 1.1754944e-38, %v335
    %v337 = vsel %vm334, %v336, %v332
    %v338 = vmul.f32 1.0, %v337
    %v339 = vrcp.pop %v323
    %v340 = vmul.f32 %v323, %v339
    %v341 = vsub.f32 1.0, %v340
    %v342 = vmul.f32 %v339, %v341
    %v343 = vadd.f32 %v339, %v342
    %vm344 = vweird.f32 %v323
    %vm345 = vweird.f32 %v339
    %vm346 = vmor %vm344, %vm345
    %v347 = vsel %vm346, %v339, %v343
    %v348 = vand.u32 2147483647, %v323
    %vm349 = vcmp.eq.f32.partialorder %v348, 8.507059e+37
    %v350 = vand.u32 %v323, 2147483648
    %v351 = vor.u32 1.1754944e-38, %v350
    %v352 = vsel %vm349, %v351, %v347
    %v353 = vmul.f32 1.0, %v352
    %356 = vrot.lane.b32.xlu0 %v237, 32
    %v357 = vpop.permute.xlu0 %356
    %358 = vrot.lane.b32.xlu0 %v240, 32
    %v359 = vpop.permute.xlu0 %358
    %v362 = vmul.f32 %v338, %v357
    %v363 = vmul.f32 %v353, %v359
    %366 = vrot.lane.b32.xlu0 %v362, 96
    %v367 = vpop.permute.xlu0 %366
    %368 = vrot.lane.b32.xlu0 %v363, 96
    %v369 = vpop.permute.xlu0 %368
    %vm372 = vcmask 130048
    %v374 = vsel %vm372, %v175, 0
    %376 = vmatpush.msra.mxu0 0.0
    %377 = vmatpush.msra.mxu0 0.0
    %378 = vmatpush.msra.mxu0 0.0
    %379 = vmatpush.msra.mxu0 0.0
    %380 = vmatpush.msra.mxu0 0.0
    %381 = vmatpush.msra.mxu0 0.0
    %382 = vmatpush.msra.mxu0 0.0
    %383 = vmatpush.msra.mxu0 0.0
    %384 = vmatpush.msra.mxu0 0.0
    %385 = vmatpush.msra.mxu0 0.0
    %386 = vmatpush.msra.mxu0 0.0
    %387 = vmatpush.msra.mxu0 0.0
    %388 = vmatpush.msra.mxu0 0.0
    %389 = vmatpush.msra.mxu0 0.0
    %390 = vmatpush.msra.mxu0 %v369
    %391 = vmatpush.msra.mxu0 %v367
    %392 = vmatmul.f32.gmra.mxu0 %v374
    %v393 = vpop.f32.mrf.mxu0
    %v394 = vadd.f32 0.0, %v393
    %395 = vdwg.mxu0
    %v396 = vsel %vm372, %v175, 0.0
    %397 = vadd.xlane.f32.xlu0 %v396
    %v398 = vpop.xlane.xlu0 %397
    %v399 = vmax.f32 %v398, 1.0
    %v400 = vadd.f32 %v142, %v394
    %v401 = vrcp.pop %v399
    %v402 = vmul.f32 %v399, %v401
    %v403 = vsub.f32 1.0, %v402
    %v404 = vmul.f32 %v401, %v403
    %v405 = vadd.f32 %v401, %v404
    %vm406 = vweird.f32 %v399
    %vm407 = vweird.f32 %v401
    %vm408 = vmor %vm406, %vm407
    %v409 = vsel %vm408, %v401, %v405
    %v410 = vand.u32 2147483647, %v399
    %vm411 = vcmp.eq.f32.partialorder %v410, 8.507059e+37
    %v412 = vand.u32 %v399, 2147483648
    %v413 = vor.u32 1.1754944e-38, %v412
    %v414 = vsel %vm411, %v413, %v409
    %v415 = vmul.f32 %v400, %v414
    %v416 = vadd.f32 %v415, %v162
    %v417 = vmax.f32 %v416, 0.0
    %v418 = vld [vmem:[%s4] sm:$0x1]
    %v419 = vld [vmem:[%s5] sm:$0x1]
    %v420 = vsel %vm120, %v417, 0.0
    %421 = vadd.xlane.f32.xlu0 %v420
    %v422 = vpop.xlane.xlu0 %421
    %v423 = vrcp.pop 32.0
    %v424 = vmul.f32 32.0, %v423
    %v425 = vsub.f32 1.0, %v424
    %v426 = vmul.f32 %v423, %v425
    %v427 = vadd.f32 %v423, %v426
    %vm428 = vweird.f32 %v423
    %v429 = vsel %vm428, %v423, %v427
    %v430 = vmul.f32 %v422, %v429
    %v431 = vsub.f32 %v417, %v430
    %v432 = vmul.f32 %v431, %v431
    %v433 = vsel %vm120, %v432, 0.0
    %434 = vadd.xlane.f32.xlu0 %v433
    %v435 = vpop.xlane.xlu0 %434
    %v436 = vmul.f32 %v435, %v429
    %v437 = vadd.f32 %v436, 1e-05
    %v438 = vrsqrt.pop %v437
    %v439 = vmul.f32 %v438, %v437
    %v440 = vmul.f32 %v439, %v438
    %v441 = vmul.f32 0.5, %v440
    %v442 = vsub.f32 1.5, %v441
    %v443 = vmul.f32 %v438, %v442
    %vm444 = vweird.f32 %v437
    %vm445 = vweird.f32 %v438
    %vm446 = vmor %vm444, %vm445
    %v447 = vsel %vm446, %v438, %v443
    %v448 = vmul.f32 %v431, %v447
    %v450 = vperm.slane %v418, 0
    %v452 = vmul.f32 %v448, %v450
    %v454 = vperm.slane %v419, 0
    %v456 = vadd.f32 %v452, %v454
    %v457 = vadd.f32 %v456, %v105
    %459 = vrot.lane.b32.xlu0 %v164, 96
    %v460 = vpop.permute.xlu0 %459
    %462 = vrot.lane.b32.xlu0 %v162, 64
    %v463 = vpop.permute.xlu0 %462
    %v464 = vsel %vm212, %v460, 0
    %v466 = vsel %vm212, %v463, 0
    %468 = vmatpush.xpose.msra.mxu0 0.0
    %469 = vmatpush.xpose.msra.mxu0 0.0
    %470 = vmatpush.xpose.msra.mxu0 0.0
    %471 = vmatpush.xpose.msra.mxu0 0.0
    %472 = vmatpush.xpose.msra.mxu0 0.0
    %473 = vmatpush.xpose.msra.mxu0 0.0
    %474 = vmatpush.xpose.msra.mxu0 0.0
    %475 = vmatpush.xpose.msra.mxu0 0.0
    %476 = vmatpush.xpose.msra.mxu0 0.0
    %477 = vmatpush.xpose.msra.mxu0 0.0
    %478 = vmatpush.xpose.msra.mxu0 0.0
    %479 = vmatpush.xpose.msra.mxu0 0.0
    %480 = vmatpush.xpose.msra.mxu0 0.0
    %481 = vmatpush.xpose.msra.mxu0 0.0
    %482 = vmatpush.xpose.msra.mxu0 0.0
    %483 = vmatpush.xpose.msra.mxu0 %v466
    %484 = vmatmul.f32.gmra.mxu0 %v464
    %v485 = vpop.f32.mrf.mxu0
    %v486 = vadd.f32 0.0, %v485
    %487 = vdwg.mxu0
    %488 = vrot.lane.b32.xlu0 %v164, 88
    %v489 = vpop.permute.xlu0 %488
    %490 = vrot.lane.b32.xlu0 %v162, 56
    %v491 = vpop.permute.xlu0 %490
    %v492 = vsel %vm212, %v489, 0
    %v494 = vsel %vm212, %v491, 0
    %496 = vmatpush.xpose.msra.mxu0 0.0
    %497 = vmatpush.xpose.msra.mxu0 0.0
    %498 = vmatpush.xpose.msra.mxu0 0.0
    %499 = vmatpush.xpose.msra.mxu0 0.0
    %500 = vmatpush.xpose.msra.mxu0 0.0
    %501 = vmatpush.xpose.msra.mxu0 0.0
    %502 = vmatpush.xpose.msra.mxu0 0.0
    %503 = vmatpush.xpose.msra.mxu0 0.0
    %504 = vmatpush.xpose.msra.mxu0 0.0
    %505 = vmatpush.xpose.msra.mxu0 0.0
    %506 = vmatpush.xpose.msra.mxu0 0.0
    %507 = vmatpush.xpose.msra.mxu0 0.0
    %508 = vmatpush.xpose.msra.mxu0 0.0
    %509 = vmatpush.xpose.msra.mxu0 0.0
    %510 = vmatpush.xpose.msra.mxu0 0.0
    %511 = vmatpush.xpose.msra.mxu0 %v494
    %512 = vmatmul.f32.gmra.mxu0 %v492
    %v513 = vpop.f32.mrf.mxu0
    %v514 = vadd.f32 0.0, %v513
    %515 = vdwg.mxu0
    %516 = vrot.lane.b32.xlu0 %v164, 80
    %v517 = vpop.permute.xlu0 %516
    %518 = vrot.lane.b32.xlu0 %v162, 48
    %v519 = vpop.permute.xlu0 %518
    %v520 = vsel %vm212, %v517, 0
    %v522 = vsel %vm212, %v519, 0
    %524 = vmatpush.xpose.msra.mxu0 0.0
    %525 = vmatpush.xpose.msra.mxu0 0.0
    %526 = vmatpush.xpose.msra.mxu0 0.0
    %527 = vmatpush.xpose.msra.mxu0 0.0
    %528 = vmatpush.xpose.msra.mxu0 0.0
    %529 = vmatpush.xpose.msra.mxu0 0.0
    %530 = vmatpush.xpose.msra.mxu0 0.0
    %531 = vmatpush.xpose.msra.mxu0 0.0
    %532 = vmatpush.xpose.msra.mxu0 0.0
    %533 = vmatpush.xpose.msra.mxu0 0.0
    %534 = vmatpush.xpose.msra.mxu0 0.0
    %535 = vmatpush.xpose.msra.mxu0 0.0
    %536 = vmatpush.xpose.msra.mxu0 0.0
    %537 = vmatpush.xpose.msra.mxu0 0.0
    %538 = vmatpush.xpose.msra.mxu0 0.0
    %539 = vmatpush.xpose.msra.mxu0 %v522
    %540 = vmatmul.f32.gmra.mxu0 %v520
    %v541 = vpop.f32.mrf.mxu0
    %v542 = vadd.f32 0.0, %v541
    %543 = vdwg.mxu0
    %544 = vrot.lane.b32.xlu0 %v164, 72
    %v545 = vpop.permute.xlu0 %544
    %546 = vrot.lane.b32.xlu0 %v162, 40
    %v547 = vpop.permute.xlu0 %546
    %v548 = vsel %vm212, %v545, 0
    %v550 = vsel %vm212, %v547, 0
    %552 = vmatpush.xpose.msra.mxu0 0.0
    %553 = vmatpush.xpose.msra.mxu0 0.0
    %554 = vmatpush.xpose.msra.mxu0 0.0
    %555 = vmatpush.xpose.msra.mxu0 0.0
    %556 = vmatpush.xpose.msra.mxu0 0.0
    %557 = vmatpush.xpose.msra.mxu0 0.0
    %558 = vmatpush.xpose.msra.mxu0 0.0
    %559 = vmatpush.xpose.msra.mxu0 0.0
    %560 = vmatpush.xpose.msra.mxu0 0.0
    %561 = vmatpush.xpose.msra.mxu0 0.0
    %562 = vmatpush.xpose.msra.mxu0 0.0
    %563 = vmatpush.xpose.msra.mxu0 0.0
    %564 = vmatpush.xpose.msra.mxu0 0.0
    %565 = vmatpush.xpose.msra.mxu0 0.0
    %566 = vmatpush.xpose.msra.mxu0 0.0
    %567 = vmatpush.xpose.msra.mxu0 %v550
    %568 = vmatmul.f32.gmra.mxu0 %v548
    %v569 = vpop.f32.mrf.mxu0
    %v570 = vadd.f32 0.0, %v569
    %571 = vdwg.mxu0
    %v572 = vsel %vm212, %v486, -inf
    %573 = vmax.xlane.f32.xlu0 %v572
    %v574 = vpop.xlane.xlu0 %573
    %v575 = vsel %vm212, %v514, -inf
    %576 = vmax.xlane.f32.xlu0 %v575
    %v577 = vpop.xlane.xlu0 %576
    %v578 = vsel %vm212, %v542, -inf
    %579 = vmax.xlane.f32.xlu0 %v578
    %v580 = vpop.xlane.xlu0 %579
    %v581 = vsel %vm212, %v570, -inf
    %582 = vmax.xlane.f32.xlu0 %v581
    %v583 = vpop.xlane.xlu0 %582
    %v584 = vsub.f32 %v486, %v574
    %v585 = vsub.f32 %v514, %v577
    %v586 = vsub.f32 %v542, %v580
    %v587 = vsub.f32 %v570, %v583
    %v588 = vmul.f32 %v584, 1.442695
    %v589 = vpow.pop %v588
    %v590 = vmul.f32 %v585, 1.442695
    %v591 = vpow.pop %v590
    %v592 = vmul.f32 %v586, 1.442695
    %v593 = vpow.pop %v592
    %v594 = vmul.f32 %v587, 1.442695
    %v595 = vpow.pop %v594
    %v596 = vsel %vm212, %v589, 0.0
    %597 = vadd.xlane.f32.xlu0 %v596
    %v598 = vpop.xlane.xlu0 %597
    %v599 = vsel %vm212, %v591, 0.0
    %600 = vadd.xlane.f32.xlu0 %v599
    %v601 = vpop.xlane.xlu0 %600
    %v602 = vsel %vm212, %v593, 0.0
    %603 = vadd.xlane.f32.xlu0 %v602
    %v604 = vpop.xlane.xlu0 %603
    %v605 = vsel %vm212, %v595, 0.0
    %606 = vadd.xlane.f32.xlu0 %v605
    %v607 = vpop.xlane.xlu0 %606
    %v608 = vrcp.pop %v598
    %v609 = vmul.f32 %v598, %v608
    %v610 = vsub.f32 1.0, %v609
    %v611 = vmul.f32 %v608, %v610
    %v612 = vadd.f32 %v608, %v611
    %vm613 = vweird.f32 %v598
    %vm614 = vweird.f32 %v608
    %vm615 = vmor %vm613, %vm614
    %v616 = vsel %vm615, %v608, %v612
    %v617 = vand.u32 2147483647, %v598
    %vm618 = vcmp.eq.f32.partialorder %v617, 8.507059e+37
    %v619 = vand.u32 %v598, 2147483648
    %v620 = vor.u32 1.1754944e-38, %v619
    %v621 = vsel %vm618, %v620, %v616
    %v622 = vmul.f32 %v589, %v621
    %v623 = vrcp.pop %v601
    %v624 = vmul.f32 %v601, %v623
    %v625 = vsub.f32 1.0, %v624
    %v626 = vmul.f32 %v623, %v625
    %v627 = vadd.f32 %v623, %v626
    %vm628 = vweird.f32 %v601
    %vm629 = vweird.f32 %v623
    %vm630 = vmor %vm628, %vm629
    %v631 = vsel %vm630, %v623, %v627
    %v632 = vand.u32 2147483647, %v601
    %vm633 = vcmp.eq.f32.partialorder %v632, 8.507059e+37
    %v634 = vand.u32 %v601, 2147483648
    %v635 = vor.u32 1.1754944e-38, %v634
    %v636 = vsel %vm633, %v635, %v631
    %v637 = vmul.f32 %v591, %v636
    %v638 = vrcp.pop %v604
    %v639 = vmul.f32 %v604, %v638
    %v640 = vsub.f32 1.0, %v639
    %v641 = vmul.f32 %v638, %v640
    %v642 = vadd.f32 %v638, %v641
    %vm643 = vweird.f32 %v604
    %vm644 = vweird.f32 %v638
    %vm645 = vmor %vm643, %vm644
    %v646 = vsel %vm645, %v638, %v642
    %v647 = vand.u32 2147483647, %v604
    %vm648 = vcmp.eq.f32.partialorder %v647, 8.507059e+37
    %v649 = vand.u32 %v604, 2147483648
    %v650 = vor.u32 1.1754944e-38, %v649
    %v651 = vsel %vm648, %v650, %v646
    %v652 = vmul.f32 %v593, %v651
    %v653 = vrcp.pop %v607
    %v654 = vmul.f32 %v607, %v653
    %v655 = vsub.f32 1.0, %v654
    %v656 = vmul.f32 %v653, %v655
    %v657 = vadd.f32 %v653, %v656
    %vm658 = vweird.f32 %v607
    %vm659 = vweird.f32 %v653
    %vm660 = vmor %vm658, %vm659
    %v661 = vsel %vm660, %v653, %v657
    %v662 = vand.u32 2147483647, %v607
    %vm663 = vcmp.eq.f32.partialorder %v662, 8.507059e+37
    %v664 = vand.u32 %v607, 2147483648
    %v665 = vor.u32 1.1754944e-38, %v664
    %v666 = vsel %vm663, %v665, %v661
    %v667 = vmul.f32 %v595, %v666
    %668 = vrot.lane.b32.xlu0 %v162, 32
    %v669 = vpop.permute.xlu0 %668
    %v672 = vsel %vm212, %v622, 0
    %674 = vmatpush.msra.mxu0 0.0
    %675 = vmatpush.msra.mxu0 0.0
    %676 = vmatpush.msra.mxu0 0.0
    %677 = vmatpush.msra.mxu0 0.0
    %678 = vmatpush.msra.mxu0 0.0
    %679 = vmatpush.msra.mxu0 0.0
    %680 = vmatpush.msra.mxu0 0.0
    %681 = vmatpush.msra.mxu0 0.0
    %682 = vmatpush.msra.mxu0 0.0
    %683 = vmatpush.msra.mxu0 0.0
    %684 = vmatpush.msra.mxu0 0.0
    %685 = vmatpush.msra.mxu0 0.0
    %686 = vmatpush.msra.mxu0 0.0
    %687 = vmatpush.msra.mxu0 0.0
    %688 = vmatpush.msra.mxu0 0.0
    %689 = vmatpush.msra.mxu0 %v669
    %690 = vmatmul.f32.gmra.mxu0 %v672
    %v691 = vpop.f32.mrf.mxu0
    %v692 = vadd.f32 0.0, %v691
    %693 = vdwg.mxu0
    %694 = vrot.lane.b32.xlu0 %v162, 24
    %v695 = vpop.permute.xlu0 %694
    %v698 = vsel %vm212, %v637, 0
    %700 = vmatpush.msra.mxu0 0.0
    %701 = vmatpush.msra.mxu0 0.0
    %702 = vmatpush.msra.mxu0 0.0
    %703 = vmatpush.msra.mxu0 0.0
    %704 = vmatpush.msra.mxu0 0.0
    %705 = vmatpush.msra.mxu0 0.0
    %706 = vmatpush.msra.mxu0 0.0
    %707 = vmatpush.msra.mxu0 0.0
    %708 = vmatpush.msra.mxu0 0.0
    %709 = vmatpush.msra.mxu0 0.0
    %710 = vmatpush.msra.mxu0 0.0
    %711 = vmatpush.msra.mxu0 0.0
    %712 = vmatpush.msra.mxu0 0.0
    %713 = vmatpush.msra.mxu0 0.0
    %714 = vmatpush.msra.mxu0 0.0
    %715 = vmatpush.msra.mxu0 %v695
    %716 = vmatmul.f32.gmra.mxu0 %v698
    %v717 = vpop.f32.mrf.mxu0
    %v718 = vadd.f32 0.0, %v717
    %719 = vdwg.mxu0
    %720 = vrot.lane.b32.xlu0 %v162, 16
    %v721 = vpop.permute.xlu0 %720
    %v724 = vsel %vm212, %v652, 0
    %726 = vmatpush.msra.mxu0 0.0
    %727 = vmatpush.msra.mxu0 0.0
    %728 = vmatpush.msra.mxu0 0.0
    %729 = vmatpush.msra.mxu0 0.0
    %730 = vmatpush.msra.mxu0 0.0
    %731 = vmatpush.msra.mxu0 0.0
    %732 = vmatpush.msra.mxu0 0.0
    %733 = vmatpush.msra.mxu0 0.0
    %734 = vmatpush.msra.mxu0 0.0
    %735 = vmatpush.msra.mxu0 0.0
    %736 = vmatpush.msra.mxu0 0.0
    %737 = vmatpush.msra.mxu0 0.0
    %738 = vmatpush.msra.mxu0 0.0
    %739 = vmatpush.msra.mxu0 0.0
    %740 = vmatpush.msra.mxu0 0.0
    %741 = vmatpush.msra.mxu0 %v721
    %742 = vmatmul.f32.gmra.mxu0 %v724
    %v743 = vpop.f32.mrf.mxu0
    %v744 = vadd.f32 0.0, %v743
    %745 = vdwg.mxu0
    %746 = vrot.lane.b32.xlu0 %v162, 8
    %v747 = vpop.permute.xlu0 %746
    %v750 = vsel %vm212, %v667, 0
    %752 = vmatpush.msra.mxu0 0.0
    %753 = vmatpush.msra.mxu0 0.0
    %754 = vmatpush.msra.mxu0 0.0
    %755 = vmatpush.msra.mxu0 0.0
    %756 = vmatpush.msra.mxu0 0.0
    %757 = vmatpush.msra.mxu0 0.0
    %758 = vmatpush.msra.mxu0 0.0
    %759 = vmatpush.msra.mxu0 0.0
    %760 = vmatpush.msra.mxu0 0.0
    %761 = vmatpush.msra.mxu0 0.0
    %762 = vmatpush.msra.mxu0 0.0
    %763 = vmatpush.msra.mxu0 0.0
    %764 = vmatpush.msra.mxu0 0.0
    %765 = vmatpush.msra.mxu0 0.0
    %766 = vmatpush.msra.mxu0 0.0
    %767 = vmatpush.msra.mxu0 %v747
    %768 = vmatmul.f32.gmra.mxu0 %v750
    %v769 = vpop.f32.mrf.mxu0
    %v770 = vadd.f32 0.0, %v769
    %771 = vdwg.mxu0
    %773 = vrot.lane.b32.xlu0 %v718, 8
    %v774 = vpop.permute.xlu0 %773
    %777 = vrot.lane.b32.xlu0 %v744, 16
    %v778 = vpop.permute.xlu0 %777
    %781 = vrot.lane.b32.xlu0 %v770, 24
    %v782 = vpop.permute.xlu0 %781
    %v784 = vsel %vm212, %v692, %v774
    %v785 = vsel %vm372, %v784, %v778
    %vm786 = vcmask 195584
    %v787 = vsel %vm786, %v785, %v782
    %v788 = vld [vmem:[%s8] sm:$0xff]
    %v789 = vld [vmem:[%s8 + $0x8] sm:$0xff]
    %v790 = vld [vmem:[%s8 + $0x10] sm:$0xff]
    %v791 = vld [vmem:[%s8 + $0x18] sm:$0xff]
    %v792 = vld [vmem:[%s9] sm:$0x1]
    %v794 = vperm.slane %v792, 0
    %v797 = vsel %vm120, %v787, 0
    %799 = vmatpush.msra.mxu0 0.0
    %800 = vmatpush.msra.mxu0 0.0
    %801 = vmatpush.msra.mxu0 0.0
    %802 = vmatpush.msra.mxu0 0.0
    %803 = vmatpush.msra.mxu0 0.0
    %804 = vmatpush.msra.mxu0 0.0
    %805 = vmatpush.msra.mxu0 0.0
    %806 = vmatpush.msra.mxu0 0.0
    %807 = vmatpush.msra.mxu0 0.0
    %808 = vmatpush.msra.mxu0 0.0
    %809 = vmatpush.msra.mxu0 0.0
    %810 = vmatpush.msra.mxu0 0.0
    %811 = vmatpush.msra.mxu0 %v791
    %812 = vmatpush.msra.mxu0 %v790
    %813 = vmatpush.msra.mxu0 %v789
    %814 = vmatpush.msra.mxu0 %v788
    %815 = vmatmul.f32.gmra.mxu0 %v797
    %v816 = vpop.f32.mrf.mxu0
    %v817 = vadd.f32 %v794, %v816
    %818 = vdwg.mxu0
    %v819 = vmax.f32 %v817, 0.0
    %v820 = vld [vmem:[%s6] sm:$0x1]
    %v821 = vld [vmem:[%s7] sm:$0x1]
    %v822 = vsel %vm120, %v819, 0.0
    %823 = vadd.xlane.f32.xlu0 %v822
    %v824 = vpop.xlane.xlu0 %823
    %v825 = vmul.f32 %v824, %v429
    %v826 = vsub.f32 %v819, %v825
    %v827 = vmul.f32 %v826, %v826
    %v828 = vsel %vm120, %v827, 0.0
    %829 = vadd.xlane.f32.xlu0 %v828
    %v830 = vpop.xlane.xlu0 %829
    %v831 = vmul.f32 %v830, %v429
    %v832 = vadd.f32 %v831, 1e-05
    %v833 = vrsqrt.pop %v832
    %v834 = vmul.f32 %v833, %v832
    %v835 = vmul.f32 %v834, %v833
    %v836 = vmul.f32 0.5, %v835
    %v837 = vsub.f32 1.5, %v836
    %v838 = vmul.f32 %v833, %v837
    %vm839 = vweird.f32 %v832
    %vm840 = vweird.f32 %v833
    %vm841 = vmor %vm839, %vm840
    %v842 = vsel %vm841, %v833, %v838
    %v843 = vmul.f32 %v826, %v842
    %v845 = vperm.slane %v820, 0
    %v847 = vmul.f32 %v843, %v845
    %v849 = vperm.slane %v821, 0
    %v851 = vadd.f32 %v847, %v849
    %v852 = vadd.f32 %v851, %v105
    %v853 = vadd.f32 %v457, %v852
    %v854 = vld [vmem:[#allocation8] sm:$0xff]
    %v855 = vld [vmem:[#allocation8 + $0x8] sm:$0xff]
    %v856 = vld [vmem:[#allocation8 + $0x10] sm:$0xff]
    %v857 = vld [vmem:[#allocation8 + $0x18] sm:$0xff]
    %v858 = vld [vmem:[%s11] sm:$0x1]
    %v860 = vperm.slane %v858, 0
    %v863 = vsel %vm120, %v853, 0
    %865 = vmatpush.msra.mxu0 0.0
    %866 = vmatpush.msra.mxu0 0.0
    %867 = vmatpush.msra.mxu0 0.0
    %868 = vmatpush.msra.mxu0 0.0
    %869 = vmatpush.msra.mxu0 0.0
    %870 = vmatpush.msra.mxu0 0.0
    %871 = vmatpush.msra.mxu0 0.0
    %872 = vmatpush.msra.mxu0 0.0
    %873 = vmatpush.msra.mxu0 0.0
    %874 = vmatpush.msra.mxu0 0.0
    %875 = vmatpush.msra.mxu0 0.0
    %876 = vmatpush.msra.mxu0 0.0
    %877 = vmatpush.msra.mxu0 %v857
    %878 = vmatpush.msra.mxu0 %v856
    %879 = vmatpush.msra.mxu0 %v855
    %880 = vmatpush.msra.mxu0 %v854
    %881 = vmatmul.f32.gmra.mxu0 %v863
    %v882 = vpop.f32.mrf.mxu0
    %v883 = vadd.f32 %v860, %v882
    %884 = vdwg.mxu0
    %v885 = vmax.f32 %v883, 0.0
    %v886 = vld [vmem:[%s12] sm:$0xff]
    %v887 = vld [vmem:[%s12 + $0x8] sm:$0xff]
    %v888 = vld [vmem:[%s12 + $0x10] sm:$0xff]
    %v889 = vld [vmem:[%s12 + $0x18] sm:$0xff]
    %v890 = vld [vmem:[%s12 + $0x20] sm:$0xff]
    %v891 = vld [vmem:[%s12 + $0x28] sm:$0xff]
    %v892 = vld [vmem:[%s12 + $0x30] sm:$0xff]
    %v893 = vld [vmem:[%s12 + $0x38] sm:$0xff]
    %v894 = vld [vmem:[%s13] sm:$0x1]
    %v896 = vperm.slane %v894, 0
    %vm898 = vcmask 523264
    %v900 = vsel %vm898, %v885, 0
    %902 = vmatpush.msra.mxu0 0.0
    %903 = vmatpush.msra.mxu0 0.0
    %904 = vmatpush.msra.mxu0 0.0
    %905 = vmatpush.msra.mxu0 0.0
    %906 = vmatpush.msra.mxu0 0.0
    %907 = vmatpush.msra.mxu0 0.0
    %908 = vmatpush.msra.mxu0 0.0
    %909 = vmatpush.msra.mxu0 0.0
    %910 = vmatpush.msra.mxu0 %v893
    %911 = vmatpush.msra.mxu0 %v892
    %912 = vmatpush.msra.mxu0 %v891
    %913 = vmatpush.msra.mxu0 %v890
    %914 = vmatpush.msra.mxu0 %v889
    %915 = vmatpush.msra.mxu0 %v888
    %916 = vmatpush.msra.mxu0 %v887
    %917 = vmatpush.msra.mxu0 %v886
    %918 = vmatmul.f32.gmra.mxu0 %v900
    %v919 = vpop.f32.mrf.mxu0
    %v920 = vadd.f32 %v896, %v919
    %921 = vdwg.mxu0
    %v922 = vadd.f32 %v853, %v920
    %v923 = vmul.f32 %v922, %v922
    %v924 = vsel %vm120, %v923, 0.0
    %925 = vadd.xlane.f32.xlu0 %v924
    %v926 = vpop.xlane.xlu0 %925
    %v927 = vrsqrt.pop %v926
    %v928 = vmul.f32 %v927, %v926
    %v929 = vmul.f32 %v928, %v927
    %v930 = vmul.f32 0.5, %v929
    %v931 = vsub.f32 1.5, %v930
    %v932 = vmul.f32 %v927, %v931
    %v933 = vmul.f32 %v926, %v932
    %vm934 = vcmp.eq.f32.partialorder %v926, inf
    %v935 = vsel %vm934, %v926, %v933
    %vm936 = vcmp.eq.f32.partialorder %v926, 0.0
    %v937 = vand.u32 %v926, 2147483648
    %v938 = vsel %vm936, %v937, %v935
    %v939 = vmax.f32 %v938, 1e-12
    %v940 = vrcp.pop %v939
    %v941 = vmul.f32 %v939, %v940
    %v942 = vsub.f32 1.0, %v941
    %v943 = vmul.f32 %v940, %v942
    %v944 = vadd.f32 %v940, %v943
    %vm945 = vweird.f32 %v939
    %vm946 = vweird.f32 %v940
    %vm947 = vmor %vm945, %vm946
    %v948 = vsel %vm947, %v940, %v944
    %v949 = vand.u32 2147483647, %v939
    %vm950 = vcmp.eq.f32.partialorder %v949, 8.507059e+37
    %v951 = vand.u32 %v939, 2147483648
    %v952 = vor.u32 1.1754944e-38, %v951
    %v953 = vsel %vm950, %v952, %v948
    %v954 = vmul.f32 %v922, %v953
    %955 = vst.msk [vmem:[#allocation10] sm:$0xff] %vm120, %v954
    // Predicated region
    $region74: #{tpu_custom_call.1} parent=1 // pred_check
      _
    $region75: #{tpu_custom_call.1} parent=1 // pred_check_branch
      %957 = sbr.rel (0) target = $region77
    $region76: #{tpu_custom_call.1} parent=1 // pred_region
      %959 = vsyncadd [#allocation4], 0
      %s961 = sshll.u32 [#allocation10], 4
      %s962 = int_to_ptr.vmem [resolvable:$true] %s961
      %s963 = sshll.u32 %s14, 4
      %s964 = int_to_ptr.hbm [resolvable:$true] %s963
      %966 = dma.vmem_to_hbm [thread:$0]  %s962, 128, %s964, [#allocation4]
    $region77: #{tpu_custom_call.1} parent=1 // pred_fallthru
      _
    // Predicated region
    $region78: #{tpu_custom_call.1} parent=1 // pred_check
      _
    $region79: #{tpu_custom_call.1} parent=1 // pred_check_branch
      %968 = sbr.rel (0) target = $region81
    $region80: #{tpu_custom_call.1} parent=1 // pred_region
      %970 = dma.done [#allocation4], 128
    $region81: #{tpu_custom_call.1} parent=1 // pred_fallthru
      _
    %971 = vsyncpa [#allocation3], 1
    %972 = vsyncpa [#allocation6], 1
    %973 = vsyncpa [#allocation9], 1
    %974 = vsyncpa [#allocation4], 1

</llo_original>
